<compile_context>
chip_gen: v5e
topology: v5e:2x2
jax: 0.10.0
libtpu: 0.0.40
codegen_flags: <defaults>
</compile_context>

<pallas_src>
import functools

import jax
import jax.numpy as jnp
from jax import lax
from jax.experimental import pallas as pl
from jax.experimental.pallas import tpu as pltpu


def _round_up(x, m):
    return ((x + m - 1) // m) * m


def _vmem_capacity_bytes():
    """Physical VMEM of the current TPU generation; conservative fallback."""
    try:
        return int(pltpu.get_tpu_info().vmem_capacity_bytes)
    except Exception:
        return 64 << 20  # v7x per-TensorCore VMEM (smallest of v5e/v6e/v7x)


# ---------------------------------------------------------------------------
# Resident-table path: one-hot MXU gather (vectorized, lane-dense stores)
# ---------------------------------------------------------------------------
def _embed_onehot_kernel(labels_ref, table_ref, out_ref, *, num_rows):
    # labels_ref : VMEM (block_b, 1) int32 label block
    # table_ref  : VMEM (V_pad, H) embedding table (constant index_map -> resident)
    # out_ref    : VMEM (block_b, H) output tile
    labs = labels_ref[...]                               # (block_b, 1)
    labs = jnp.clip(labs, 0, num_rows - 1)               # in-kernel clamp (free on VPU)
    block_b = labs.shape[0]
    v_pad = table_ref.shape[0]
    col = lax.broadcasted_iota(jnp.int32, (block_b, v_pad), 1)
    one_hot = jnp.where(labs == col, 1.0, 0.0).astype(table_ref.dtype)  # (block_b, V_pad)
    out = jnp.dot(one_hot, table_ref[...], preferred_element_type=jnp.float32)
    out_ref[...] = out.astype(out_ref.dtype)


def _lookup_resident(labels, table, *, block_b, v_pad, vmem_limit,
                     single_buffer_table, semantics):
    B = labels.shape[0]
    V, H = table.shape

    if v_pad != V:
        table = jnp.pad(table, ((0, v_pad - V), (0, 0)))

    B_pad = _round_up(B, block_b)
    if B_pad != B:
        labels = jnp.pad(labels, (0, B_pad - B))          # padded slots gather row 0
    labels2d = labels.astype(jnp.int32).reshape(B_pad, 1)

    table_spec_kwargs = {}
    if single_buffer_table:
        # Constant index_map -> double buffering is pure VMEM waste; single-buffer it.
        table_spec_kwargs["pipeline_mode"] = pl.Buffered(1)

    out = pl.pallas_call(
        functools.partial(_embed_onehot_kernel, num_rows=V),
        out_shape=jax.ShapeDtypeStruct((B_pad, H), table.dtype),
        grid=(B_pad // block_b,),
        in_specs=[
            pl.BlockSpec((block_b, 1), lambda i: (i, 0)),               # labels block
            pl.BlockSpec((v_pad, H), lambda i: (0, 0), **table_spec_kwargs),  # resident table
        ],
        out_specs=pl.BlockSpec((block_b, H), lambda i: (i, 0)),
        compiler_params=pltpu.CompilerParams(
            dimension_semantics=(semantics,),
            vmem_limit_bytes=int(vmem_limit),
        ),
    )(labels2d, table)

    return out[:B]


# ---------------------------------------------------------------------------
# Fallback path for tables too large to keep VMEM-resident:
# scalar-prefetch per-row DMA gather (HBM read traffic = B*H, not V*H).
# ---------------------------------------------------------------------------
def _embed_rowcopy_kernel(labels_smem, row_ref, out_ref):
    del labels_smem
    out_ref[...] = row_ref[...]


def _lookup_rowgather(labels, table, *, vmem_limit):
    B = labels.shape[0]
    V, H = table.shape
    # TPU does no bounds check on DMA'd block indices -> clamp in the wrapper.
    labels = jnp.clip(labels.astype(jnp.int32), 0, V - 1)

    grid_spec = pltpu.PrefetchScalarGridSpec(
        num_scalar_prefetch=1,                            # labels -> SMEM
        grid=(B,),
        in_specs=[pl.BlockSpec((1, H), lambda i, lab: (lab[i], 0))],
        out_specs=pl.BlockSpec((1, H), lambda i, lab: (i, 0)),
    )
    return pl.pallas_call(
        _embed_rowcopy_kernel,
        out_shape=jax.ShapeDtypeStruct((B, H), table.dtype),
        grid_spec=grid_spec,
        compiler_params=pltpu.CompilerParams(
            dimension_semantics=("arbitrary",),
            vmem_limit_bytes=int(vmem_limit),
        ),
    )(labels, table)


# ---------------------------------------------------------------------------
# Dispatcher
# ---------------------------------------------------------------------------
def embedding_lookup_pallas(labels, table, *, block_b=None):
    """Gather rows of `table` ([V, H]) at `labels` ([B]) -> [B, H]."""
    B = labels.shape[0]
    V, H = table.shape
    itemsize = jnp.dtype(table.dtype).itemsize

    vmem_cap = _vmem_capacity_bytes()
    budget = int(0.80 * vmem_cap)

    # Pad vocab to a multiple of 256 (covers v5e/v6e/v7x MXU alignment).
    v_pad = max(256, _round_up(V, 256))

    # Block of labels per grid step: big to amortize per-step overhead, but cap the
    # one-hot intermediate (block_b * v_pad * 4B) at ~8 MiB of vreg/VMEM pressure.
    if block_b is None:
        block_b = min(1024, _round_up(B, 8))
    block_b = max(8, _round_up(block_b, 8))
    onehot_cap = max(8, ((8 << 20) // (v_pad * 4)) // 8 * 8)
    block_b = min(block_b, onehot_cap)

    table_bytes = v_pad * H * itemsize
    other_bytes = (2 * block_b * 4                        # double-buffered label tiles
                   + 2 * block_b * H * itemsize           # double-buffered output tiles
                   + block_b * v_pad * 4                  # one-hot intermediate
                   + (2 << 20))                           # slack

    if 2 * table_bytes + other_bytes <= budget:
        table_resident_bytes, single_buffer = 2 * table_bytes, False
    elif table_bytes + other_bytes <= budget:
        table_resident_bytes, single_buffer = table_bytes, True   # pl.Buffered(1)
    else:
        # Too large to keep resident: per-row DMA gather.
        return _lookup_rowgather(labels, table,
                                 vmem_limit=max(min(budget, 32 << 20), 16 << 20))

    num_blocks = _round_up(B, block_b) // block_b
    # Only split the label grid across TensorCores when there is enough of it;
    # otherwise megacore would duplicate the resident table (and its HBM DMA).
    semantics = "parallel" if num_blocks >= 8 else "arbitrary"

    # Always pass an explicit limit: v5e's default scoped-VMEM limit is 16 MiB.
    vmem_limit = min(table_resident_bytes + other_bytes, int(0.9 * vmem_cap))
    vmem_limit = max(vmem_limit, 32 << 20)

    return _lookup_resident(
        labels, table,
        block_b=block_b, v_pad=v_pad, vmem_limit=vmem_limit,
        single_buffer_table=single_buffer, semantics=semantics,
    )


# ---------------------------------------------------------------------------
# LabelEmbedder forward (mirrors the PyTorch module semantics)
# ---------------------------------------------------------------------------
def token_drop(labels, num_classes, dropout_prob, force_drop_ids=None, rng=None):
    if force_drop_ids is None:
        if rng is None:
            raise ValueError("token_drop with random dropout requires an rng key.")
        drop_ids = jax.random.uniform(rng, (labels.shape[0],)) < dropout_prob
    else:
        drop_ids = force_drop_ids == 1
    return jnp.where(drop_ids, num_classes, labels)


def label_embedder_forward(
    labels,
    embedding_table,
    num_classes,
    train,
    dropout_prob,
    force_drop_ids=None,
    rng=None,
):
    use_dropout = dropout_prob > 0
    if (train and use_dropout) or (force_drop_ids is not None):
        labels = token_drop(labels, num_classes, dropout_prob, force_drop_ids, rng)
    return embedding_lookup_pallas(labels, embedding_table)


# ---------------------------------------------------------------------------
# Demo / self-test
# ---------------------------------------------------------------------------
if __name__ == "__main__":
    num_classes = 10
    hidden_size = 128
    add_cfg_embedding = True
    batch = 8

    key = jax.random.PRNGKey(0)
    k_table, k_labels, k_drop = jax.random.split(key, 3)

    # nn.Embedding(num_classes + 1, hidden_size) default init ~ N(0, 1)
    vocab = num_classes + int(add_cfg_embedding)
    embedding_table = jax.random.normal(k_table, (vocab, hidden_size), dtype=jnp.float32)

    labels = jax.random.randint(k_labels, (batch,), 0, num_classes, dtype=jnp.int32)

    # Deterministic CFG drop pattern (force_drop_ids path of token_drop).
    force_drop_ids = jnp.array([0, 1, 0, 0, 1, 0, 0, 0], dtype=jnp.int32)

    out = label_embedder_forward(
        labels,
        embedding_table,
        num_classes=num_classes,
        train=True,
        dropout_prob=0.1,
        force_drop_ids=force_drop_ids,
        rng=k_drop,
    )
    out = jax.block_until_ready(out)

    # Pure-JAX reference for correctness.
    dropped_labels = jnp.where(force_drop_ids == 1, num_classes, labels)
    ref = jnp.take(embedding_table, dropped_labels, axis=0)

    assert out.shape == (batch, hidden_size), out.shape
    assert out.dtype == jnp.float32, out.dtype
    assert jnp.allclose(out, ref, rtol=1e-6, atol=1e-6), (
        "Pallas embedding gather mismatch vs reference"
    )

    # Eval path (no dropout, no force ids): plain lookup.
    out_eval = label_embedder_forward(
        labels, embedding_table, num_classes, train=False, dropout_prob=0.1
    )
    out_eval = jax.block_until_ready(out_eval)
    assert jnp.allclose(out_eval, jnp.take(embedding_table, labels, axis=0),
                        rtol=1e-6, atol=1e-6)

    # Also exercise a non-multiple-of-block batch (padding path).
    labels_odd = jax.random.randint(k_labels, (5,), 0, num_classes, dtype=jnp.int32)
    out_odd = jax.block_until_ready(
        embedding_lookup_pallas(labels_odd, embedding_table)
    )
    assert jnp.allclose(out_odd, jnp.take(embedding_table, labels_odd, axis=0),
                        rtol=1e-6, atol=1e-6)

    print("KERNEL_OK")
</pallas_src>

<mosaic_0001>
module attributes {stable_mosaic.version = 11 : i64} {
  func.func @_embed_onehot_kernel(%arg0: i32, %arg1: memref<8x1xi32, #tpu.memory_space<vmem>>, %arg2: memref<256x128xf32, #tpu.memory_space<vmem>>, %arg3: memref<8x128xf32, #tpu.memory_space<vmem>>) attributes {dimension_semantics = [#tpu.dimension_semantics<arbitrary>], iteration_bounds = array<i64: 1>, scalar_prefetch = 0 : i64, scratch_operands = 0 : i64, tpu.core_type = #tpu.core_type<tc>, window_params = [{transform_indices = @transform_0, window_bounds = array<i64: 8, 1>}, {pipeline_mode = #tpu.pipeline_mode<synchronous>, transform_indices = @transform_1, window_bounds = array<i64: 256, 128>}, {transform_indices = @transform_2, window_bounds = array<i64: 8, 128>}]} {
    %c0 = arith.constant 0 : index
    %c0_0 = arith.constant 0 : index
    %0 = vector.load %arg1[%c0, %c0_0] : memref<8x1xi32, #tpu.memory_space<vmem>>, vector<8x1xi32>
    %c0_i32 = arith.constant 0 : i32
    %c10_i32 = arith.constant 10 : i32
    %1 = vector.broadcast %c0_i32 : i32 to vector<8x1xi32>
    %2 = arith.maxsi %1, %0 : vector<8x1xi32>
    %3 = vector.broadcast %c10_i32 : i32 to vector<8x1xi32>
    %4 = arith.minsi %3, %2 : vector<8x1xi32>
    %5 = tpu.iota {dimensions = array<i32: 1>} : vector<8x256xi32>
    %6 = vector.broadcast %4 : vector<8x1xi32> to vector<8x256xi32>
    %7 = arith.cmpi eq, %6, %5 : vector<8x256xi32>
    %cst = arith.constant 1.000000e+00 : f32
    %cst_1 = arith.constant 0.000000e+00 : f32
    %8 = vector.broadcast %cst : f32 to vector<8x256xf32>
    %9 = vector.broadcast %cst_1 : f32 to vector<8x256xf32>
    %10 = arith.select %7, %8, %9 : vector<8x256xi1>, vector<8x256xf32>
    %c0_2 = arith.constant 0 : index
    %c0_3 = arith.constant 0 : index
    %11 = vector.load %arg2[%c0_2, %c0_3] : memref<256x128xf32, #tpu.memory_space<vmem>>, vector<256x128xf32>
    %cst_4 = arith.constant dense<0.000000e+00> : vector<8x128xf32>
    %12 = tpu.matmul %10, %11, %cst_4 {dimension_numbers = #tpu.dot_dimension_numbers<[1], [0], [0], [1], [0, 0, 1, 1], [], []>} : vector<8x256xf32>, vector<256x128xf32>, vector<8x128xf32> -> vector<8x128xf32>
    %c0_5 = arith.constant 0 : index
    %c0_6 = arith.constant 0 : index
    %13 = vector.load %arg3[%c0_5, %c0_6] : memref<8x128xf32, #tpu.memory_space<vmem>>, vector<8x128xf32>
    tpu.vector_store %arg3[%c0_5, %c0_6], %12 {strides = array<i32>} : memref<8x128xf32, #tpu.memory_space<vmem>>, vector<8x128xf32>,
    return
  }
  func.func @transform_0(%arg0: i32) -> (i32, i32) {
    %c0_i32 = arith.constant 0 : i32
    %c0_i32_0 = arith.constant 0 : i32
    return %arg0, %c0_i32 : i32, i32
  }
  func.func @transform_1(%arg0: i32) -> (i32, i32) {
    %c0_i32 = arith.constant 0 : i32
    %c0_i32_0 = arith.constant 0 : i32
    %c0_i32_1 = arith.constant 0 : i32
    return %c0_i32, %c0_i32_0 : i32, i32
  }
  func.func @transform_2(%arg0: i32) -> (i32, i32) {
    %c0_i32 = arith.constant 0 : i32
    %c0_i32_0 = arith.constant 0 : i32
    return %arg0, %c0_i32 : i32, i32
  }
}

</mosaic_0001>

<llo_original>
// kernel: tpu_custom_call.1
$region0: #{tpu_custom_call.1}
  #allocation0 [shape = 'u32[]', space=smem, size = 0x4, offset = 0x4, fixed_abs, tag = 'smem constant byte address 0x4 - core index']
  #allocation1 [shape = 'u32[72,128]{1,0:T(1,128)}', space=vmem, size = 0x9000, scoped, tag = 'internal scratch']
  %s0 = inlined_call_operand.vmem [shape: s32[8,1], index: 0, kind: input, shape index: {}]
  %s1 = inlined_call_operand.hbm [shape: f32[256,128], index: 1, kind: input, shape index: {}]
  %s2 = inlined_call_operand.hbm [shape: f32[8,128], index: 2, kind: output, shape index: {}]
  %s3 = sld [smem:[#allocation0]]
  $region22: #{tpu_custom_call.1} parent=0
    _
  %s5 = ssub.s32 1, %s3
  %s6 = scalar_select 0, %s5, %s3
  $region1: #{tpu_custom_call.1} parent=0
    #allocation2 [shape = 'u8[131072]{0}', space=vmem, size = 0x20000, scoped, tag = 'input window, operand 1, single buffered']
    #allocation3 [shape = 's32[1]{0}', space=sflag, size = 0x4, scoped, tag = 'scoped memory for tpu_custom_call.1']
    #allocation4 [shape = 's32[1]{0}', space=sflag, size = 0x4, scoped, tag = 'scoped memory for tpu_custom_call.1']
    #allocation5 [shape = 'u8[4096]{0}', space=vmem, size = 0x1000, scoped, tag = 'output window, operand 0, single buffered']
    %7 = vsyncpa [#allocation3], 0
    %8 = vsyncpa [#allocation4], 0
    // Predicated region
    $region2: #{tpu_custom_call.1} parent=1 // pred_check
      _
    $region3: #{tpu_custom_call.1} parent=1 // pred_check_branch
      %10 = sbr.rel (0) target = $region5
    $region4: #{tpu_custom_call.1} parent=1 // pred_region
      _
    $region5: #{tpu_custom_call.1} parent=1 // pred_fallthru
      _
    // Predicated region
    $region6: #{tpu_custom_call.1} parent=1 // pred_check
      _
    $region7: #{tpu_custom_call.1} parent=1 // pred_check_branch
      %12 = sbr.rel (0) target = $region9
    $region8: #{tpu_custom_call.1} parent=1 // pred_region
      %14 = vsyncadd [#allocation3], 0
      %s15 = sshll.u32 %s1, 4
      %s16 = int_to_ptr.hbm [resolvable:$true] %s15
      %s17 = sshll.u32 [#allocation2], 4
      %s18 = int_to_ptr.vmem [resolvable:$true] %s17
      %23 = dma.hbm_to_vmem [thread:$0]  %s16, 4096, %s18, [#allocation3], 128, 128, 8
    $region9: #{tpu_custom_call.1} parent=1 // pred_fallthru
      _
    // Predicated region
    $region10: #{tpu_custom_call.1} parent=1 // pred_check
      _
    $region11: #{tpu_custom_call.1} parent=1 // pred_check_branch
      %25 = sbr.rel (0) target = $region13
    $region12: #{tpu_custom_call.1} parent=1 // pred_region
      %27 = dma.done [#allocation3], 4096
    $region13: #{tpu_custom_call.1} parent=1 // pred_fallthru
      _
    %v28 = vld [vmem:[%s0] sm:$0xff]
    %vm29 = vcmp.gt.s32.totalorder %v28, 0
    %v30 = vsel %vm29, %v28, 0
    %vm31 = vcmp.lt.s32.totalorder %v30, 10
    %v32 = vsel %vm31, %v30, 10
    %v33 = vlaneseq
    %v34 = vand.u32 %v33, 127
    %v35 = vadd.s32 %v34, 128
    %36 = vset.pattern.permute.xlu0 0
    %37 = vperm.xlu0 %36, %v32
    %v38 = vpop.permute.xlu0 %37
    %vm39 = vcmp.eq.s32.totalorder %v38, %v34
    %vm40 = vcmp.eq.s32.totalorder %v38, %v35
    %v41 = vsel %vm39, 1.0, 0.0
    %v42 = vsel %vm40, 1.0, 0.0
    %v43 = vld [vmem:[#allocation2] sm:$0xff]
    %v44 = vld [vmem:[#allocation2 + $0x8] sm:$0xff]
    %v45 = vld [vmem:[#allocation2 + $0x10] sm:$0xff]
    %v46 = vld [vmem:[#allocation2 + $0x18] sm:$0xff]
    %v47 = vld [vmem:[#allocation2 + $0x20] sm:$0xff]
    %v48 = vld [vmem:[#allocation2 + $0x28] sm:$0xff]
    %v49 = vld [vmem:[#allocation2 + $0x30] sm:$0xff]
    %v50 = vld [vmem:[#allocation2 + $0x38] sm:$0xff]
    %v51 = vld [vmem:[#allocation2 + $0x40] sm:$0xff]
    %v52 = vld [vmem:[#allocation2 + $0x48] sm:$0xff]
    %v53 = vld [vmem:[#allocation2 + $0x50] sm:$0xff]
    %v54 = vld [vmem:[#allocation2 + $0x58] sm:$0xff]
    %v55 = vld [vmem:[#allocation2 + $0x60] sm:$0xff]
    %v56 = vld [vmem:[#allocation2 + $0x68] sm:$0xff]
    %v57 = vld [vmem:[#allocation2 + $0x70] sm:$0xff]
    %v58 = vld [vmem:[#allocation2 + $0x78] sm:$0xff]
    %v59 = vld [vmem:[#allocation2 + $0x80] sm:$0xff]
    %v60 = vld [vmem:[#allocation2 + $0x88] sm:$0xff]
    %v61 = vld [vmem:[#allocation2 + $0x90] sm:$0xff]
    %v62 = vld [vmem:[#allocation2 + $0x98] sm:$0xff]
    %v63 = vld [vmem:[#allocation2 + $0xa0] sm:$0xff]
    %v64 = vld [vmem:[#allocation2 + $0xa8] sm:$0xff]
    %v65 = vld [vmem:[#allocation2 + $0xb0] sm:$0xff]
    %v66 = vld [vmem:[#allocation2 + $0xb8] sm:$0xff]
    %v67 = vld [vmem:[#allocation2 + $0xc0] sm:$0xff]
    %v68 = vld [vmem:[#allocation2 + $0xc8] sm:$0xff]
    %v69 = vld [vmem:[#allocation2 + $0xd0] sm:$0xff]
    %v70 = vld [vmem:[#allocation2 + $0xd8] sm:$0xff]
    %v71 = vld [vmem:[#allocation2 + $0xe0] sm:$0xff]
    %v72 = vld [vmem:[#allocation2 + $0xe8] sm:$0xff]
    %v73 = vld [vmem:[#allocation2 + $0xf0] sm:$0xff]
    %v74 = vld [vmem:[#allocation2 + $0xf8] sm:$0xff]
    %75 = vmatpush.msra.mxu0 %v58
    %76 = vmatpush.msra.mxu0 %v57
    %77 = vmatpush.msra.mxu0 %v56
    %78 = vmatpush.msra.mxu0 %v55
    %79 = vmatpush.msra.mxu0 %v54
    %80 = vmatpush.msra.mxu0 %v53
    %81 = vmatpush.msra.mxu0 %v52
    %82 = vmatpush.msra.mxu0 %v51
    %83 = vmatpush.msra.mxu0 %v50
    %84 = vmatpush.msra.mxu0 %v49
    %85 = vmatpush.msra.mxu0 %v48
    %86 = vmatpush.msra.mxu0 %v47
    %87 = vmatpush.msra.mxu0 %v46
    %88 = vmatpush.msra.mxu0 %v45
    %89 = vmatpush.msra.mxu0 %v44
    %90 = vmatpush.msra.mxu0 %v43
    %91 = vmatmul.f32.gmra.mxu0 %v41
    %v92 = vpop.f32.mrf.mxu0
    %v93 = vadd.f32 0.0, %v92
    %94 = vdwg.mxu0
    %95 = vmatpush.msra.mxu0 %v74
    %96 = vmatpush.msra.mxu0 %v73
    %97 = vmatpush.msra.mxu0 %v72
    %98 = vmatpush.msra.mxu0 %v71
    %99 = vmatpush.msra.mxu0 %v70
    %100 = vmatpush.msra.mxu0 %v69
    %101 = vmatpush.msra.mxu0 %v68
    %102 = vmatpush.msra.mxu0 %v67
    %103 = vmatpush.msra.mxu0 %v66
    %104 = vmatpush.msra.mxu0 %v65
    %105 = vmatpush.msra.mxu0 %v64
    %106 = vmatpush.msra.mxu0 %v63
    %107 = vmatpush.msra.mxu0 %v62
    %108 = vmatpush.msra.mxu0 %v61
    %109 = vmatpush.msra.mxu0 %v60
    %110 = vmatpush.msra.mxu0 %v59
    %111 = vmatmul.f32.gmra.mxu0 %v42
    %v112 = vpop.f32.mrf.mxu0
    %v113 = vadd.f32 %v93, %v112
    %114 = vdwg.mxu0
    %115 = vst [vmem:[#allocation5] sm:$0xff] %v113
    // Predicated region
    $region14: #{tpu_custom_call.1} parent=1 // pred_check
      _
    $region15: #{tpu_custom_call.1} parent=1 // pred_check_branch
      %117 = sbr.rel (0) target = $region17
    $region16: #{tpu_custom_call.1} parent=1 // pred_region
      %119 = vsyncadd [#allocation4], 0
      %s121 = sshll.u32 [#allocation5], 4
      %s122 = int_to_ptr.vmem [resolvable:$true] %s121
      %s123 = sshll.u32 %s2, 4
      %s124 = int_to_ptr.hbm [resolvable:$true] %s123
      %126 = dma.vmem_to_hbm [thread:$0]  %s122, 128, %s124, [#allocation4]
    $region17: #{tpu_custom_call.1} parent=1 // pred_fallthru
      _
    // Predicated region
    $region18: #{tpu_custom_call.1} parent=1 // pred_check
      _
    $region19: #{tpu_custom_call.1} parent=1 // pred_check_branch
      %128 = sbr.rel (0) target = $region21
    $region20: #{tpu_custom_call.1} parent=1 // pred_region
      %130 = dma.done [#allocation4], 128
    $region21: #{tpu_custom_call.1} parent=1 // pred_fallthru
      _
    %131 = vsyncpa [#allocation3], 1
    %132 = vsyncpa [#allocation4], 1

</llo_original>
